<compile_context>
chip_gen: v5e
topology: v5e:2x2
jax: 0.10.0
libtpu: 0.0.40
codegen_flags: <defaults>
</compile_context>

<pallas_src>
import functools

import jax
import jax.numpy as jnp
from jax.experimental import pallas as pl
from jax.experimental.pallas import tpu as pltpu

LANES = 128          # lane width
MAX_TILE_ROWS = 512  # rows per grid step (512*128*4B = 256 KiB f32 per input/buffer)
N_OUTER = 2          # outer "parallel" split (2 TensorCores on v7x)


def _ipow(x, p):
    """x**p. Small integer exponent -> explicit VPU multiplies; else jnp.power."""
    pf = float(p)
    if pf.is_integer() and 0 <= int(pf) <= 16:
        p = int(pf)
        if p == 0:
            return jnp.ones_like(x)
        result = None
        base = x
        while p:
            if p & 1:
                result = base if result is None else result * base
            p >>= 1
            if p:
                base = base * base
        return result
    return jnp.power(x, pf)  # non-integer fallback (EUP exp/log)


def _focal_terms(pred, gt, posw, alpha, beta):
    pred = pred.astype(jnp.float32)
    gt = gt.astype(jnp.float32)
    posw = posw.astype(jnp.float32)
    # pos_loss = log(pred) * (1 - pred)^alpha * pos_weights
    pos_loss = jnp.log(pred) * _ipow(1.0 - pred, alpha) * posw
    # neg_loss = log(1 - pred) * pred^alpha * (1 - gt)^beta * [gt < 1]
    neg_inds = (gt < 1.0).astype(jnp.float32)
    neg_weights = _ipow(1.0 - gt, beta)
    neg_loss = jnp.log(1.0 - pred) * _ipow(pred, alpha) * neg_weights * neg_inds
    return pos_loss + neg_loss


def _kernel_masked(pred_ref, gt_ref, posw_ref, mask_ref, out_ref, acc_ref,
                   *, alpha, beta):
    i = pl.program_id(1)

    @pl.when(i == 0)
    def _():
        acc_ref[...] = jnp.zeros_like(acc_ref)

    loss = _focal_terms(pred_ref[...], gt_ref[...], posw_ref[...], alpha, beta)
    loss = loss * mask_ref[...].astype(jnp.float32)
    # Fold (tile_rows, 128) -> (tile_rows//8, 8, 128) and add into the (8,128)
    # accumulator (tile-aligned reshape, pure VPU adds).
    acc_ref[...] += jnp.sum(loss.reshape(-1, 8, LANES), axis=0)

    @pl.when(i == pl.num_programs(1) - 1)
    def _():
        out_ref[...] = acc_ref[...]


def _kernel_unmasked(pred_ref, gt_ref, posw_ref, out_ref, acc_ref,
                     *, alpha, beta):
    i = pl.program_id(1)

    @pl.when(i == 0)
    def _():
        acc_ref[...] = jnp.zeros_like(acc_ref)

    loss = _focal_terms(pred_ref[...], gt_ref[...], posw_ref[...], alpha, beta)
    acc_ref[...] += jnp.sum(loss.reshape(-1, 8, LANES), axis=0)

    @pl.when(i == pl.num_programs(1) - 1)
    def _():
        out_ref[...] = acc_ref[...]


def _flatten_pad(x, rows, pad_value):
    """Ravel to (rows, 128) in the array's native dtype; pad only if needed."""
    flat = jnp.ravel(x)
    total = rows * LANES
    if total != flat.shape[0]:
        flat = jnp.pad(flat, (0, total - flat.shape[0]), constant_values=pad_value)
    return flat.reshape(rows, LANES)


def focal_loss(pred, gt, pos_weights, keep_mask=None, alpha=2, beta=4):
    """Pallas TPU implementation of FocalLoss.forward. Returns an f32 scalar."""
    n_elem = pred.size

    rows_raw = -(-n_elem // LANES)                         # cdiv
    tile_rows = min(MAX_TILE_ROWS, ((rows_raw + 7) // 8) * 8)
    n_tiles = -(-rows_raw // tile_rows)
    n_outer = min(N_OUTER, n_tiles)
    n_tiles = -(-n_tiles // n_outer) * n_outer             # round up to outer split
    n_inner = n_tiles // n_outer
    rows = n_tiles * tile_rows

    # Neutral padding: pred=0.5, gt=1.0, posw=0, mask=0 -> exactly 0 contribution
    # (no inf/NaN, works for both the masked and unmasked kernels).
    pred2 = _flatten_pad(pred, rows, 0.5)
    gt2 = _flatten_pad(gt, rows, 1.0)
    posw2 = _flatten_pad(pos_weights, rows, 0.0)

    row_spec = pl.BlockSpec((tile_rows, LANES), lambda o, i: (o * n_inner + i, 0))
    out_spec = pl.BlockSpec((8, LANES), lambda o, i: (o, 0))

    if keep_mask is None:
        kernel = functools.partial(_kernel_unmasked,
                                   alpha=float(alpha), beta=float(beta))
        inputs = (pred2, gt2, posw2)
        in_specs = [row_spec, row_spec, row_spec]
    else:
        if keep_mask.dtype == jnp.bool_:
            keep_mask = keep_mask.astype(pred.dtype)
        mask2 = _flatten_pad(keep_mask, rows, 0.0)
        kernel = functools.partial(_kernel_masked,
                                   alpha=float(alpha), beta=float(beta))
        inputs = (pred2, gt2, posw2, mask2)
        in_specs = [row_spec, row_spec, row_spec, row_spec]

    partials = pl.pallas_call(
        kernel,
        out_shape=jax.ShapeDtypeStruct((n_outer * 8, LANES), jnp.float32),
        grid_spec=pltpu.PrefetchScalarGridSpec(
            num_scalar_prefetch=0,
            grid=(n_outer, n_inner),
            in_specs=in_specs,
            out_specs=out_spec,
            scratch_shapes=[pltpu.VMEM((8, LANES), jnp.float32)],
        ),
        compiler_params=pltpu.CompilerParams(
            dimension_semantics=("parallel", "arbitrary")),
    )(*inputs)

    # Tiny final reduction (n_outer*8*128 f32) + negation in plain XLA.
    return -jnp.sum(partials)


def _reference_focal_loss(pred, gt, pos_weights, keep_mask=None, alpha=2, beta=4):
    pred = pred.astype(jnp.float32)
    gt = gt.astype(jnp.float32)
    pos_weights = pos_weights.astype(jnp.float32)
    pos_loss = jnp.log(pred) * jnp.power(1.0 - pred, alpha) * pos_weights
    neg_inds = (gt < 1.0).astype(jnp.float32)
    neg_weights = jnp.power(1.0 - gt, beta)
    neg_loss = jnp.log(1.0 - pred) * jnp.power(pred, alpha) * neg_weights * neg_inds
    if keep_mask is not None:
        keep_mask = keep_mask.astype(jnp.float32)
        pos_loss = (pos_loss * keep_mask).sum()
        neg_loss = (neg_loss * keep_mask).sum()
    else:
        pos_loss = pos_loss.sum()
        neg_loss = neg_loss.sum()
    return -(pos_loss + neg_loss)


if __name__ == "__main__":
    key = jax.random.PRNGKey(0)

    def make_inputs(shape, k):
        k1, k2, k3, k4, k5 = jax.random.split(k, 5)
        pred = jax.nn.sigmoid(jax.random.normal(k1, shape, jnp.float32))
        gt = jax.random.uniform(k2, shape, jnp.float32)
        peak = jax.random.uniform(k3, shape) > 0.95
        gt = jnp.where(peak, 1.0, gt * 0.9)
        pos_weights = jnp.where(peak, jax.random.uniform(k4, shape) + 0.5, 0.0)
        keep_mask = (jax.random.uniform(k5, shape) > 0.1).astype(jnp.float32)
        return pred, gt, pos_weights, keep_mask

    k_small, k_big = jax.random.split(key)

    # Small NCHW shape consistent with the module.
    pred, gt, posw, mask = make_inputs((2, 4, 16, 16), k_small)

    out = jax.block_until_ready(focal_loss(pred, gt, posw, mask))
    ref = _reference_focal_loss(pred, gt, posw, mask)
    assert jnp.allclose(out, ref, rtol=1e-5, atol=1e-4), (out, ref)

    # keep_mask=None branch (3-input kernel variant).
    out2 = jax.block_until_ready(focal_loss(pred, gt, posw, None))
    ref2 = _reference_focal_loss(pred, gt, posw, None)
    assert jnp.allclose(out2, ref2, rtol=1e-5, atol=1e-4), (out2, ref2)

    # Larger heatmap exercising the multi-tile grid and the 2-way outer
    # (megacore) split: rows=2048 -> tile_rows=512, grid=(2, 2).
    predb, gtb, poswb, maskb = make_inputs((2, 8, 128, 128), k_big)
    out3 = jax.block_until_ready(focal_loss(predb, gtb, poswb, maskb))
    ref3 = _reference_focal_loss(predb, gtb, poswb, maskb)
    assert jnp.allclose(out3, ref3, rtol=1e-4, atol=1e-2), (out3, ref3)

    out4 = jax.block_until_ready(focal_loss(predb, gtb, poswb, None))
    ref4 = _reference_focal_loss(predb, gtb, poswb, None)
    assert jnp.allclose(out4, ref4, rtol=1e-4, atol=1e-2), (out4, ref4)

    print("KERNEL_OK")
</pallas_src>

<mosaic_0001>
module attributes {stable_mosaic.version = 11 : i64} {
  func.func @_kernel_masked(%arg0: i32, %arg1: i32, %arg2: memref<16x128xf32, #tpu.memory_space<vmem>>, %arg3: memref<16x128xf32, #tpu.memory_space<vmem>>, %arg4: memref<16x128xf32, #tpu.memory_space<vmem>>, %arg5: memref<16x128xf32, #tpu.memory_space<vmem>>, %arg6: memref<8x128xf32, #tpu.memory_space<vmem>>, %arg7: memref<8x128xf32, #tpu.memory_space<vmem>>) attributes {dimension_semantics = [#tpu.dimension_semantics<parallel>, #tpu.dimension_semantics<arbitrary>], iteration_bounds = array<i64: 1, 1>, scalar_prefetch = 0 : i64, scratch_operands = 1 : i64, tpu.core_type = #tpu.core_type<tc>, window_params = [{transform_indices = @transform_0, window_bounds = array<i64: 16, 128>}, {transform_indices = @transform_1, window_bounds = array<i64: 16, 128>}, {transform_indices = @transform_2, window_bounds = array<i64: 16, 128>}, {transform_indices = @transform_3, window_bounds = array<i64: 16, 128>}, {transform_indices = @transform_4, window_bounds = array<i64: 8, 128>}]} {
    %c0_i32 = arith.constant 0 : i32
    %0 = arith.cmpi eq, %arg1, %c0_i32 : i32
    %1 = arith.extui %0 : i1 to i32
    %c0_i32_0 = arith.constant 0 : i32
    %2 = arith.cmpi ne, %1, %c0_i32_0 : i32
    scf.if %2 {
      %cst_18 = arith.constant 0.000000e+00 : f32
      %38 = vector.broadcast %cst_18 : f32 to vector<8x128xf32>
      %c0_19 = arith.constant 0 : index
      %c0_20 = arith.constant 0 : index
      %39 = vector.load %arg7[%c0_19, %c0_20] : memref<8x128xf32, #tpu.memory_space<vmem>>, vector<8x128xf32>
      tpu.vector_store %arg7[%c0_19, %c0_20], %38 {strides = array<i32>} : memref<8x128xf32, #tpu.memory_space<vmem>>, vector<8x128xf32>,
    } else {
    }
    %c0 = arith.constant 0 : index
    %c0_1 = arith.constant 0 : index
    %3 = vector.load %arg2[%c0, %c0_1] : memref<16x128xf32, #tpu.memory_space<vmem>>, vector<16x128xf32>
    %c0_2 = arith.constant 0 : index
    %c0_3 = arith.constant 0 : index
    %4 = vector.load %arg3[%c0_2, %c0_3] : memref<16x128xf32, #tpu.memory_space<vmem>>, vector<16x128xf32>
    %c0_4 = arith.constant 0 : index
    %c0_5 = arith.constant 0 : index
    %5 = vector.load %arg4[%c0_4, %c0_5] : memref<16x128xf32, #tpu.memory_space<vmem>>, vector<16x128xf32>
    %6 = math.log %3 : vector<16x128xf32>
    %cst = arith.constant 1.000000e+00 : f32
    %7 = vector.broadcast %cst : f32 to vector<16x128xf32>
    %8 = arith.subf %7, %3 : vector<16x128xf32>
    %9 = arith.mulf %8, %8 : vector<16x128xf32>
    %10 = arith.mulf %6, %9 : vector<16x128xf32>
    %11 = arith.mulf %10, %5 : vector<16x128xf32>
    %cst_6 = arith.constant 1.000000e+00 : f32
    %12 = vector.broadcast %cst_6 : f32 to vector<16x128xf32>
    %13 = arith.cmpf olt, %4, %12 : vector<16x128xf32>
    %14 = arith.extui %13 : vector<16x128xi1> to vector<16x128xi32>
    %15 = arith.sitofp %14 : vector<16x128xi32> to vector<16x128xf32>
    %cst_7 = arith.constant 1.000000e+00 : f32
    %16 = vector.broadcast %cst_7 : f32 to vector<16x128xf32>
    %17 = arith.subf %16, %4 : vector<16x128xf32>
    %18 = arith.mulf %17, %17 : vector<16x128xf32>
    %19 = arith.mulf %18, %18 : vector<16x128xf32>
    %cst_8 = arith.constant 1.000000e+00 : f32
    %20 = vector.broadcast %cst_8 : f32 to vector<16x128xf32>
    %21 = arith.subf %20, %3 : vector<16x128xf32>
    %22 = math.log %21 : vector<16x128xf32>
    %23 = arith.mulf %3, %3 : vector<16x128xf32>
    %24 = arith.mulf %22, %23 : vector<16x128xf32>
    %25 = arith.mulf %24, %19 : vector<16x128xf32>
    %26 = arith.mulf %25, %15 : vector<16x128xf32>
    %27 = arith.addf %11, %26 : vector<16x128xf32>
    %c0_9 = arith.constant 0 : index
    %c0_10 = arith.constant 0 : index
    %28 = vector.load %arg5[%c0_9, %c0_10] : memref<16x128xf32, #tpu.memory_space<vmem>>, vector<16x128xf32>
    %29 = arith.mulf %27, %28 : vector<16x128xf32>
    %c0_11 = arith.constant 0 : index
    %c0_12 = arith.constant 0 : index
    %30 = vector.load %arg7[%c0_11, %c0_12] : memref<8x128xf32, #tpu.memory_space<vmem>>, vector<8x128xf32>
    %31 = vector.shape_cast %29 : vector<16x128xf32> to vector<2x8x128xf32>
    %cst_13 = arith.constant dense<0.000000e+00> : vector<8x128xf32>
    %32 = vector.multi_reduction <add>, %31, %cst_13 [0] : vector<2x8x128xf32> to vector<8x128xf32>
    %33 = arith.addf %30, %32 : vector<8x128xf32>
    %c0_14 = arith.constant 0 : index
    %c0_15 = arith.constant 0 : index
    %34 = vector.load %arg7[%c0_14, %c0_15] : memref<8x128xf32, #tpu.memory_space<vmem>>, vector<8x128xf32>
    tpu.vector_store %arg7[%c0_14, %c0_15], %33 {strides = array<i32>} : memref<8x128xf32, #tpu.memory_space<vmem>>, vector<8x128xf32>,
    %c0_i32_16 = arith.constant 0 : i32
    %35 = arith.cmpi eq, %arg1, %c0_i32_16 : i32
    %36 = arith.extui %35 : i1 to i32
    %c0_i32_17 = arith.constant 0 : i32
    %37 = arith.cmpi ne, %36, %c0_i32_17 : i32
    scf.if %37 {
      %c0_18 = arith.constant 0 : index
      %c0_19 = arith.constant 0 : index
      %38 = vector.load %arg7[%c0_18, %c0_19] : memref<8x128xf32, #tpu.memory_space<vmem>>, vector<8x128xf32>
      %c0_20 = arith.constant 0 : index
      %c0_21 = arith.constant 0 : index
      %39 = vector.load %arg6[%c0_20, %c0_21] : memref<8x128xf32, #tpu.memory_space<vmem>>, vector<8x128xf32>
      tpu.vector_store %arg6[%c0_20, %c0_21], %38 {strides = array<i32>} : memref<8x128xf32, #tpu.memory_space<vmem>>, vector<8x128xf32>,
    } else {
    }
    return
  }
  func.func @transform_0(%arg0: i32, %arg1: i32) -> (i32, i32) {
    %c1_i32 = arith.constant 1 : i32
    %0 = arith.muli %arg0, %c1_i32 : i32
    %1 = arith.addi %0, %arg1 : i32
    %c0_i32 = arith.constant 0 : i32
    %c0_i32_0 = arith.constant 0 : i32
    return %1, %c0_i32 : i32, i32
  }
  func.func @transform_1(%arg0: i32, %arg1: i32) -> (i32, i32) {
    %c1_i32 = arith.constant 1 : i32
    %0 = arith.muli %arg0, %c1_i32 : i32
    %1 = arith.addi %0, %arg1 : i32
    %c0_i32 = arith.constant 0 : i32
    %c0_i32_0 = arith.constant 0 : i32
    return %1, %c0_i32 : i32, i32
  }
  func.func @transform_2(%arg0: i32, %arg1: i32) -> (i32, i32) {
    %c1_i32 = arith.constant 1 : i32
    %0 = arith.muli %arg0, %c1_i32 : i32
    %1 = arith.addi %0, %arg1 : i32
    %c0_i32 = arith.constant 0 : i32
    %c0_i32_0 = arith.constant 0 : i32
    return %1, %c0_i32 : i32, i32
  }
  func.func @transform_3(%arg0: i32, %arg1: i32) -> (i32, i32) {
    %c1_i32 = arith.constant 1 : i32
    %0 = arith.muli %arg0, %c1_i32 : i32
    %1 = arith.addi %0, %arg1 : i32
    %c0_i32 = arith.constant 0 : i32
    %c0_i32_0 = arith.constant 0 : i32
    return %1, %c0_i32 : i32, i32
  }
  func.func @transform_4(%arg0: i32, %arg1: i32) -> (i32, i32) {
    %c0_i32 = arith.constant 0 : i32
    %c0_i32_0 = arith.constant 0 : i32
    return %arg0, %c0_i32 : i32, i32
  }
}

</mosaic_0001>

<llo_original>
// kernel: tpu_custom_call.1
$region0: #{tpu_custom_call.1}
  #allocation0 [shape = 'u32[]', space=smem, size = 0x4, offset = 0x4, fixed_abs, tag = 'smem constant byte address 0x4 - core index']
  #allocation1 [shape = 'u32[72,128]{1,0:T(1,128)}', space=vmem, size = 0x9000, scoped, tag = 'internal scratch']
  #allocation2 [shape = 'f32[8,128]{1,0:T(8,128)}', space=vmem, size = 0x1000, scoped, tag = 'scratch operand']
  %s0 = inlined_call_operand.hbm [shape: f32[16,128], index: 0, kind: input, shape index: {}]
  %s1 = inlined_call_operand.hbm [shape: f32[16,128], index: 1, kind: input, shape index: {}]
  %s2 = inlined_call_operand.hbm [shape: f32[16,128], index: 2, kind: input, shape index: {}]
  %s3 = inlined_call_operand.hbm [shape: f32[16,128], index: 3, kind: input, shape index: {}]
  %s4 = inlined_call_operand.hbm [shape: f32[8,128], index: 4, kind: output, shape index: {}]
  %s5 = sld [smem:[#allocation0]]
  $region50: #{tpu_custom_call.1} parent=0
    _
  %s7 = ssub.s32 1, %s5
  %s8 = scalar_select 0, %s7, %s5
  $region1: #{tpu_custom_call.1} parent=0
    #allocation3 [shape = 'u8[8192]{0}', space=vmem, size = 0x2000, scoped, tag = 'input window, operand 0, single buffered']
    #allocation4 [shape = 's32[1]{0}', space=sflag, size = 0x4, scoped, tag = 'scoped memory for tpu_custom_call.1']
    #allocation5 [shape = 's32[1]{0}', space=sflag, size = 0x4, scoped, tag = 'scoped memory for tpu_custom_call.1']
    #allocation6 [shape = 'u8[8192]{0}', space=vmem, size = 0x2000, scoped, tag = 'input window, operand 1, single buffered']
    #allocation7 [shape = 's32[1]{0}', space=sflag, size = 0x4, scoped, tag = 'scoped memory for tpu_custom_call.1']
    #allocation8 [shape = 'u8[8192]{0}', space=vmem, size = 0x2000, scoped, tag = 'input window, operand 2, single buffered']
    #allocation9 [shape = 'u8[8192]{0}', space=vmem, size = 0x2000, scoped, tag = 'input window, operand 3, single buffered']
    #allocation10 [shape = 's32[1]{0}', space=sflag, size = 0x4, scoped, tag = 'scoped memory for tpu_custom_call.1']
    #allocation11 [shape = 'u8[4096]{0}', space=vmem, size = 0x1000, scoped, tag = 'output window, operand 0, single buffered']
    %9 = vsyncpa [#allocation4], 0
    %10 = vsyncpa [#allocation7], 0
    %11 = vsyncpa [#allocation10], 0
    %12 = vsyncpa [#allocation5], 0
    // Predicated region
    $region2: #{tpu_custom_call.1} parent=1 // pred_check
      _
    $region3: #{tpu_custom_call.1} parent=1 // pred_check_branch
      %14 = sbr.rel (0) target = $region5
    $region4: #{tpu_custom_call.1} parent=1 // pred_region
      %s15 = sadd.s32 0, 0
      %s16 = smul.u32 2, %s15
      %18 = vsyncadd [#allocation4], 0
      %s19 = smul.addr %s16, 8
      %s20 = scalar_lea.hbm %s0, %s19
      %s21 = sshll.u32 %s20, 4
      %s22 = int_to_ptr.hbm [resolvable:$true] %s21
      %s23 = sshll.u32 [#allocation3], 4
      %s24 = int_to_ptr.vmem [resolvable:$true] %s23
      %29 = dma.hbm_to_vmem [thread:$0]  %s22, 256, %s24, [#allocation4], 128, 128, 8
    $region5: #{tpu_custom_call.1} parent=1 // pred_fallthru
      _
    // Predicated region
    $region6: #{tpu_custom_call.1} parent=1 // pred_check
      _
    $region7: #{tpu_custom_call.1} parent=1 // pred_check_branch
      %31 = sbr.rel (0) target = $region9
    $region8: #{tpu_custom_call.1} parent=1 // pred_region
      %s32 = sadd.s32 0, 0
      %s33 = smul.u32 2, %s32
      %35 = vsyncadd [#allocation7], 0
      %s36 = smul.addr %s33, 8
      %s37 = scalar_lea.hbm %s1, %s36
      %s38 = sshll.u32 %s37, 4
      %s39 = int_to_ptr.hbm [resolvable:$true] %s38
      %s40 = sshll.u32 [#allocation6], 4
      %s41 = int_to_ptr.vmem [resolvable:$true] %s40
      %46 = dma.hbm_to_vmem [thread:$0]  %s39, 256, %s41, [#allocation7], 128, 128, 8
    $region9: #{tpu_custom_call.1} parent=1 // pred_fallthru
      _
    // Predicated region
    $region10: #{tpu_custom_call.1} parent=1 // pred_check
      _
    $region11: #{tpu_custom_call.1} parent=1 // pred_check_branch
      %48 = sbr.rel (0) target = $region13
    $region12: #{tpu_custom_call.1} parent=1 // pred_region
      %s49 = sadd.s32 0, 0
      %s50 = smul.u32 2, %s49
      %52 = vsyncadd [#allocation7], 0
      %s53 = smul.addr %s50, 8
      %s54 = scalar_lea.hbm %s2, %s53
      %s55 = sshll.u32 %s54, 4
      %s56 = int_to_ptr.hbm [resolvable:$true] %s55
      %s57 = sshll.u32 [#allocation8], 4
      %s58 = int_to_ptr.vmem [resolvable:$true] %s57
      %63 = dma.hbm_to_vmem [thread:$0]  %s56, 256, %s58, [#allocation7], 128, 128, 8
    $region13: #{tpu_custom_call.1} parent=1 // pred_fallthru
      _
    // Predicated region
    $region14: #{tpu_custom_call.1} parent=1 // pred_check
      _
    $region15: #{tpu_custom_call.1} parent=1 // pred_check_branch
      %65 = sbr.rel (0) target = $region17
    $region16: #{tpu_custom_call.1} parent=1 // pred_region
      %s66 = sadd.s32 0, 0
      %s67 = smul.u32 2, %s66
      %69 = vsyncadd [#allocation10], 0
      %s70 = smul.addr %s67, 8
      %s71 = scalar_lea.hbm %s3, %s70
      %s72 = sshll.u32 %s71, 4
      %s73 = int_to_ptr.hbm [resolvable:$true] %s72
      %s74 = sshll.u32 [#allocation9], 4
      %s75 = int_to_ptr.vmem [resolvable:$true] %s74
      %80 = dma.hbm_to_vmem [thread:$0]  %s73, 256, %s75, [#allocation10], 128, 128, 8
    $region17: #{tpu_custom_call.1} parent=1 // pred_fallthru
      _
    // Predicated region
    $region18: #{tpu_custom_call.1} parent=1 // pred_check
      _
    $region19: #{tpu_custom_call.1} parent=1 // pred_check_branch
      %82 = sbr.rel (0) target = $region21
    $region20: #{tpu_custom_call.1} parent=1 // pred_region
      %84 = dma.done [#allocation4], 256
    $region21: #{tpu_custom_call.1} parent=1 // pred_fallthru
      _
    // Predicated region
    $region22: #{tpu_custom_call.1} parent=1 // pred_check
      _
    $region23: #{tpu_custom_call.1} parent=1 // pred_check_branch
      %86 = sbr.rel (0) target = $region25
    $region24: #{tpu_custom_call.1} parent=1 // pred_region
      %88 = dma.done [#allocation7], 256
    $region25: #{tpu_custom_call.1} parent=1 // pred_fallthru
      _
    // Predicated region
    $region26: #{tpu_custom_call.1} parent=1 // pred_check
      _
    $region27: #{tpu_custom_call.1} parent=1 // pred_check_branch
      %90 = sbr.rel (0) target = $region29
    $region28: #{tpu_custom_call.1} parent=1 // pred_region
      %92 = dma.done [#allocation7], 256
    $region29: #{tpu_custom_call.1} parent=1 // pred_fallthru
      _
    // Predicated region
    $region30: #{tpu_custom_call.1} parent=1 // pred_check
      _
    $region31: #{tpu_custom_call.1} parent=1 // pred_check_branch
      %94 = sbr.rel (0) target = $region33
    $region32: #{tpu_custom_call.1} parent=1 // pred_region
      %96 = dma.done [#allocation10], 256
    $region33: #{tpu_custom_call.1} parent=1 // pred_fallthru
      _
    %s97 = sadd.s32 0, 0
    %s98 = smul.u32 2, %s97
    %s99 = sadd.s32 0, 0
    %s100 = smul.u32 2, %s99
    %s101 = sadd.s32 0, 0
    %s102 = smul.u32 2, %s101
    %s103 = sadd.s32 0, 0
    %s104 = smul.u32 2, %s103
    %p105 = scmp.eq.s32.totalorder 0, 0
    // Predicated region
    $region34: #{tpu_custom_call.1} parent=1 // pred_check
      %p106 = pneg %p105
    $region35: #{tpu_custom_call.1} parent=1 // pred_check_branch
      %108 = sbr.rel (%p106) target = $region37
    $region36: #{tpu_custom_call.1} parent=1 // pred_region
      %109 = vst [vmem:[#allocation2] sm:$0xff] 0.0
    $region37: #{tpu_custom_call.1} parent=1 // pred_fallthru
      _
    %v110 = vld [vmem:[#allocation3] sm:$0xff]
    %v111 = vld [vmem:[#allocation3 + $0x8] sm:$0xff]
    %v112 = vld [vmem:[#allocation6] sm:$0xff]
    %v113 = vld [vmem:[#allocation6 + $0x8] sm:$0xff]
    %v114 = vld [vmem:[#allocation8] sm:$0xff]
    %v115 = vld [vmem:[#allocation8 + $0x8] sm:$0xff]
    %v116 = vlog2.pop %v110
    %v117 = vmul.f32 %v116, 0.6931472
    %v118 = vlog2.pop %v111
    %v119 = vmul.f32 %v118, 0.6931472
    %v120 = vsub.f32 1.0, %v110
    %v121 = vsub.f32 1.0, %v111
    %v122 = vmul.f32 %v120, %v120
    %v123 = vmul.f32 %v121, %v121
    %v124 = vmul.f32 %v117, %v122
    %v125 = vmul.f32 %v119, %v123
    %v126 = vmul.f32 %v124, %v114
    %v127 = vmul.f32 %v125, %v115
    %vm128 = vcmp.lt.f32.partialorder %v112, 1.0
    %vm129 = vcmp.lt.f32.partialorder %v113, 1.0
    %v130 = vsel %vm128, 1, 0
    %v131 = vsel %vm129, 1, 0
    %v132 = vcvt.s32.f32 %v130
    %v133 = vcvt.s32.f32 %v131
    %v134 = vsub.f32 1.0, %v112
    %v135 = vsub.f32 1.0, %v113
    %v136 = vmul.f32 %v134, %v134
    %v137 = vmul.f32 %v135, %v135
    %v138 = vmul.f32 %v136, %v136
    %v139 = vmul.f32 %v137, %v137
    %v140 = vlog2.pop %v120
    %v141 = vmul.f32 %v140, 0.6931472
    %v142 = vlog2.pop %v121
    %v143 = vmul.f32 %v142, 0.6931472
    %v144 = vmul.f32 %v110, %v110
    %v145 = vmul.f32 %v111, %v111
    %v146 = vmul.f32 %v141, %v144
    %v147 = vmul.f32 %v143, %v145
    %v148 = vmul.f32 %v146, %v138
    %v149 = vmul.f32 %v147, %v139
    %v150 = vmul.f32 %v148, %v132
    %v151 = vmul.f32 %v149, %v133
    %v152 = vadd.f32 %v126, %v150
    %v153 = vadd.f32 %v127, %v151
    %v154 = vld [vmem:[#allocation9] sm:$0xff]
    %v155 = vld [vmem:[#allocation9 + $0x8] sm:$0xff]
    %v156 = vmul.f32 %v152, %v154
    %v157 = vmul.f32 %v153, %v155
    %v158 = vld [vmem:[#allocation2] sm:$0xff]
    %v159 = vadd.f32 %v156, %v157
    %v160 = vadd.f32 %v158, %v159
    %161 = vst [vmem:[#allocation2] sm:$0xff] %v160
    // Predicated region
    $region38: #{tpu_custom_call.1} parent=1 // pred_check
      %p162 = pneg %p105
    $region39: #{tpu_custom_call.1} parent=1 // pred_check_branch
      %164 = sbr.rel (%p162) target = $region41
    $region40: #{tpu_custom_call.1} parent=1 // pred_region
      %v165 = vld [vmem:[#allocation2] sm:$0xff]
      %166 = vst [vmem:[#allocation11] sm:$0xff] %v165
    $region41: #{tpu_custom_call.1} parent=1 // pred_fallthru
      _
    // Predicated region
    $region42: #{tpu_custom_call.1} parent=1 // pred_check
      _
    $region43: #{tpu_custom_call.1} parent=1 // pred_check_branch
      %168 = sbr.rel (0) target = $region45
    $region44: #{tpu_custom_call.1} parent=1 // pred_region
      %170 = vsyncadd [#allocation5], 0
      %s172 = sshll.u32 [#allocation11], 4
      %s173 = int_to_ptr.vmem [resolvable:$true] %s172
      %s174 = sshll.u32 %s4, 4
      %s175 = int_to_ptr.hbm [resolvable:$true] %s174
      %177 = dma.vmem_to_hbm [thread:$0]  %s173, 128, %s175, [#allocation5]
    $region45: #{tpu_custom_call.1} parent=1 // pred_fallthru
      _
    // Predicated region
    $region46: #{tpu_custom_call.1} parent=1 // pred_check
      _
    $region47: #{tpu_custom_call.1} parent=1 // pred_check_branch
      %179 = sbr.rel (0) target = $region49
    $region48: #{tpu_custom_call.1} parent=1 // pred_region
      %181 = dma.done [#allocation5], 128
    $region49: #{tpu_custom_call.1} parent=1 // pred_fallthru
      _
    %182 = vsyncpa [#allocation4], 1
    %183 = vsyncpa [#allocation7], 1
    %184 = vsyncpa [#allocation10], 1
    %185 = vsyncpa [#allocation5], 1

</llo_original>
